<compile_context>
chip_gen: v5e
topology: v5e:2x2
jax: 0.10.0
libtpu: 0.0.40
codegen_flags: <defaults>
</compile_context>

<pallas_src>
import jax
import jax.numpy as jnp
from jax import lax
from jax.experimental import pallas as pl
from jax.experimental.pallas import tpu as pltpu


_K_CHUNK = 512  # lanes per accumulation chunk (multiple of 128)


def _matvec_kernel(x_ref, w_ref, b_ref, o_ref):
    # x_ref: (TB, K) VMEM, w_ref: (1, K) VMEM, b_ref: (1,) SMEM, o_ref: (TB, 1) VMEM.
    # y = sum(x * w, axis=-1) + b  -- VPU multiply + XLU lane reduce, exact f32.
    tb, k = x_ref.shape
    acc = jnp.zeros((tb, 1), jnp.float32)
    # Static Python loop over static K-chunks: slice bounds are compile-time
    # constants (cheap ref views); K=1000 -> chunks of width 512 and 488. This
    # bounds the live (TB, chunk) intermediate instead of materializing (TB, K).
    for start in range(0, k, _K_CHUNK):
        stop = min(start + _K_CHUNK, k)
        xc = x_ref[:, start:stop].astype(jnp.float32)
        wc = w_ref[:, start:stop].astype(jnp.float32)   # (1, chunk) broadcast over rows
        acc = acc + jnp.sum(xc * wc, axis=-1, keepdims=True)
    o_ref[...] = (acc + b_ref[0]).astype(o_ref.dtype)


def _linear_kernel(x_ref, w_ref, b_ref, o_ref):
    # General out_dim > 1 path: contract last dims of x (TB, K) and w (O, K) on the
    # MXU -- PyTorch [out, in] weight layout used as-is, no in-kernel transpose.
    acc = lax.dot_general(
        x_ref[...], w_ref[...],
        dimension_numbers=(((1,), (1,)), ((), ())),
        preferred_element_type=jnp.float32,
    )
    o_ref[...] = (acc + b_ref[...]).astype(o_ref.dtype)


def _pick_batch_tile(batch):
    # TB=512 double-buffered f32 tiles at K~1k are ~4 MiB: safe headroom even under
    # v7x's 32 MiB scoped / 64 MiB physical VMEM (and trivially fine on v5e/v6e).
    return batch if batch <= 512 else 512


def linear_forward(x, weight, bias):
    """y = x @ weight.T + bias, weight in PyTorch [out_dim, inp_dim] layout."""
    B, inp_dim = x.shape
    out_dim, k_w = weight.shape
    assert k_w == inp_dim

    tb = _pick_batch_tile(B)
    nb = pl.cdiv(B, tb)
    params = pltpu.CompilerParams(dimension_semantics=("parallel",))

    if out_dim == 1:
        # Matvec: VPU + lane-reduce path, bias as an SMEM scalar.
        return pl.pallas_call(
            _matvec_kernel,
            out_shape=jax.ShapeDtypeStruct((B, 1), x.dtype),
            grid_spec=pltpu.PrefetchScalarGridSpec(
                num_scalar_prefetch=0,
                grid=(nb,),
                in_specs=[
                    pl.BlockSpec((tb, inp_dim), lambda i: (i, 0)),
                    # Same block index every step -> weight DMA'd once, resident.
                    pl.BlockSpec((1, inp_dim), lambda i: (0, 0)),
                    pl.BlockSpec(memory_space=pltpu.MemorySpace.SMEM),
                ],
                out_specs=pl.BlockSpec((tb, 1), lambda i: (i, 0)),
            ),
            compiler_params=params,
        )(x, weight, bias.reshape(1))

    # General path (out_dim > 1): MXU matmul contracting last dims, bias resident in VMEM.
    bias2d = bias.reshape(1, out_dim)
    return pl.pallas_call(
        _linear_kernel,
        out_shape=jax.ShapeDtypeStruct((B, out_dim), x.dtype),
        grid_spec=pltpu.PrefetchScalarGridSpec(
            num_scalar_prefetch=0,
            grid=(nb,),
            in_specs=[
                pl.BlockSpec((tb, inp_dim), lambda i: (i, 0)),
                pl.BlockSpec((out_dim, inp_dim), lambda i: (0, 0)),
                pl.BlockSpec((1, out_dim), lambda i: (0, 0)),
            ],
            out_specs=pl.BlockSpec((tb, out_dim), lambda i: (i, 0)),
        ),
        compiler_params=params,
    )(x, weight, bias2d)


if __name__ == "__main__":
    inp_dim, out_dim = 1000, 1
    batch = 8

    key = jax.random.PRNGKey(0)
    kx, kw, kb = jax.random.split(key, 3)

    # Deterministic init matching PyTorch nn.Linear default bounds:
    # U(-1/sqrt(inp_dim), 1/sqrt(inp_dim)).
    bound = 1.0 / (inp_dim ** 0.5)
    weight = jax.random.uniform(kw, (out_dim, inp_dim), jnp.float32, -bound, bound)
    bias = jax.random.uniform(kb, (out_dim,), jnp.float32, -bound, bound)

    x = jax.random.normal(kx, (batch, inp_dim), jnp.float32)

    y = linear_forward(x, weight, bias)
    jax.block_until_ready(y)

    # Reference check against plain JAX.
    y_ref = x @ weight.T + bias
    assert y.shape == (batch, out_dim)
    assert jnp.allclose(y, y_ref, atol=1e-5, rtol=1e-5)

    print("KERNEL_OK")
</pallas_src>

<mosaic_0001>
module attributes {stable_mosaic.version = 11 : i64} {
  func.func @_matvec_kernel(%arg0: i32, %arg1: memref<8x1000xf32, #tpu.memory_space<vmem>>, %arg2: memref<1x1000xf32, #tpu.memory_space<vmem>>, %arg3: memref<1xf32, #tpu.memory_space<smem>>, %arg4: memref<8x1xf32, #tpu.memory_space<vmem>>) attributes {dimension_semantics = [#tpu.dimension_semantics<parallel>], iteration_bounds = array<i64: 1>, scalar_prefetch = 0 : i64, scratch_operands = 0 : i64, tpu.core_type = #tpu.core_type<tc>, window_params = [{transform_indices = @transform_0, window_bounds = array<i64: 8, 1000>}, {pipeline_mode = #tpu.pipeline_mode<synchronous>, transform_indices = @transform_1, window_bounds = array<i64: 1, 1000>}, {transform_indices = @transform_2, window_bounds = array<i64: 1>}, {transform_indices = @transform_3, window_bounds = array<i64: 8, 1>}]} {
    %cst = arith.constant 0.000000e+00 : f32
    %0 = vector.broadcast %cst : f32 to vector<8x1xf32>
    %c0 = arith.constant 0 : index
    %c0_0 = arith.constant 0 : index
    %1 = vector.load %arg1[%c0, %c0_0] : memref<8x1000xf32, #tpu.memory_space<vmem>>, vector<8x512xf32>
    %c0_1 = arith.constant 0 : index
    %c0_2 = arith.constant 0 : index
    %2 = vector.load %arg2[%c0_1, %c0_2] : memref<1x1000xf32, #tpu.memory_space<vmem>>, vector<1x512xf32>
    %3 = vector.broadcast %2 : vector<1x512xf32> to vector<8x512xf32>
    %4 = arith.mulf %1, %3 : vector<8x512xf32>
    %cst_3 = arith.constant dense<0.000000e+00> : vector<8xf32>
    %5 = vector.multi_reduction <add>, %4, %cst_3 [1] : vector<8x512xf32> to vector<8xf32>
    %6 = vector.shape_cast %5 : vector<8xf32> to vector<8x1xf32>
    %7 = arith.addf %0, %6 : vector<8x1xf32>
    %c0_4 = arith.constant 0 : index
    %c512 = arith.constant 512 : index
    %8 = vector.load %arg1[%c0_4, %c512] : memref<8x1000xf32, #tpu.memory_space<vmem>>, vector<8x488xf32>
    %c0_5 = arith.constant 0 : index
    %c512_6 = arith.constant 512 : index
    %9 = vector.load %arg2[%c0_5, %c512_6] : memref<1x1000xf32, #tpu.memory_space<vmem>>, vector<1x488xf32>
    %10 = vector.broadcast %9 : vector<1x488xf32> to vector<8x488xf32>
    %11 = arith.mulf %8, %10 : vector<8x488xf32>
    %cst_7 = arith.constant dense<0.000000e+00> : vector<8xf32>
    %12 = vector.multi_reduction <add>, %11, %cst_7 [1] : vector<8x488xf32> to vector<8xf32>
    %13 = vector.shape_cast %12 : vector<8xf32> to vector<8x1xf32>
    %14 = arith.addf %7, %13 : vector<8x1xf32>
    %c0_8 = arith.constant 0 : index
    %15 = memref.load %arg3[%c0_8] : memref<1xf32, #tpu.memory_space<smem>>
    %16 = vector.broadcast %15 : f32 to vector<8x1xf32>
    %17 = arith.addf %14, %16 : vector<8x1xf32>
    %c0_9 = arith.constant 0 : index
    %c0_10 = arith.constant 0 : index
    %18 = vector.load %arg4[%c0_9, %c0_10] : memref<8x1xf32, #tpu.memory_space<vmem>>, vector<8x1xf32>
    tpu.vector_store %arg4[%c0_9, %c0_10], %17 {strides = array<i32>} : memref<8x1xf32, #tpu.memory_space<vmem>>, vector<8x1xf32>,
    return
  }
  func.func @transform_0(%arg0: i32) -> (i32, i32) {
    %c0_i32 = arith.constant 0 : i32
    %c0_i32_0 = arith.constant 0 : i32
    return %arg0, %c0_i32 : i32, i32
  }
  func.func @transform_1(%arg0: i32) -> (i32, i32) {
    %c0_i32 = arith.constant 0 : i32
    %c0_i32_0 = arith.constant 0 : i32
    %c0_i32_1 = arith.constant 0 : i32
    return %c0_i32, %c0_i32_0 : i32, i32
  }
  func.func @transform_2(%arg0: i32) -> i32 {
    %c0_i32 = arith.constant 0 : i32
    %c0_i32_0 = arith.constant 0 : i32
    return %c0_i32 : i32
  }
  func.func @transform_3(%arg0: i32) -> (i32, i32) {
    %c0_i32 = arith.constant 0 : i32
    %c0_i32_0 = arith.constant 0 : i32
    return %arg0, %c0_i32 : i32, i32
  }
}

</mosaic_0001>

<llo_original>
// kernel: tpu_custom_call.1
$region0: #{tpu_custom_call.1}
  #allocation0 [shape = 'u32[]', space=smem, size = 0x4, offset = 0x4, fixed_abs, tag = 'smem constant byte address 0x4 - core index']
  #allocation1 [shape = 'u32[72,128]{1,0:T(1,128)}', space=vmem, size = 0x9000, scoped, tag = 'internal scratch']
  #allocation2 [shape = 'f32[1]{0:T(128)S(6)}', space=smem, size = 0x200, scoped, tag = 'scoped memory for tpu_custom_call.1']
  %s0 = inlined_call_operand.hbm [shape: f32[8,1000], index: 0, kind: input, shape index: {}]
  %s1 = inlined_call_operand.hbm [shape: f32[1,1000], index: 1, kind: input, shape index: {}]
  %s2 = inlined_call_operand.<no memory space> [shape: f32[1], index: 2, kind: input, shape index: {}]
  %s3 = inlined_call_operand.vmem [shape: f32[8,1], index: 3, kind: output, shape index: {}]
  %s4 = sld [smem:[#allocation0]]
  $region30: #{tpu_custom_call.1} parent=0
    _
  %s6 = ssub.s32 1, %s4
  %s7 = scalar_select 0, %s6, %s4
  %8 = sst [smem:[#allocation2]] %s2
  $region1: #{tpu_custom_call.1} parent=0
    #allocation3 [shape = 'u8[32768]{0}', space=vmem, size = 0x8000, scoped, tag = 'input window, operand 0, single buffered']
    #allocation4 [shape = 's32[1]{0}', space=sflag, size = 0x4, scoped, tag = 'scoped memory for tpu_custom_call.1']
    #allocation5 [shape = 'u8[4096]{0}', space=vmem, size = 0x1000, scoped, tag = 'input window, operand 1, single buffered']
    #allocation6 [shape = 's32[1]{0}', space=sflag, size = 0x4, scoped, tag = 'scoped memory for tpu_custom_call.1']
    %9 = vsyncpa [#allocation4], 0
    %10 = vsyncpa [#allocation6], 0
    // Predicated region
    $region2: #{tpu_custom_call.1} parent=1 // pred_check
      _
    $region3: #{tpu_custom_call.1} parent=1 // pred_check_branch
      %12 = sbr.rel (0) target = $region5
    $region4: #{tpu_custom_call.1} parent=1 // pred_region
      %14 = vsyncadd [#allocation4], 0
      %s16 = sshll.u32 %s0, 4
      %s17 = int_to_ptr.hbm [resolvable:$true] %s16
      %s18 = sshll.u32 [#allocation3], 4
      %s19 = int_to_ptr.vmem [resolvable:$true] %s18
      %21 = dma.hbm_to_vmem [thread:$0]  %s17, 1024, %s19, [#allocation4]
    $region5: #{tpu_custom_call.1} parent=1 // pred_fallthru
      _
    // Predicated region
    $region6: #{tpu_custom_call.1} parent=1 // pred_check
      _
    $region7: #{tpu_custom_call.1} parent=1 // pred_check_branch
      %23 = sbr.rel (0) target = $region9
    $region8: #{tpu_custom_call.1} parent=1 // pred_region
      %25 = vsyncadd [#allocation6], 0
      %s27 = sshll.u32 %s1, 4
      %s28 = int_to_ptr.hbm [resolvable:$true] %s27
      %s29 = sshll.u32 [#allocation5], 4
      %s30 = int_to_ptr.vmem [resolvable:$true] %s29
      %32 = dma.hbm_to_vmem [thread:$0]  %s28, 128, %s30, [#allocation6]
    $region9: #{tpu_custom_call.1} parent=1 // pred_fallthru
      _
    // Predicated region
    $region10: #{tpu_custom_call.1} parent=1 // pred_check
      _
    $region11: #{tpu_custom_call.1} parent=1 // pred_check_branch
      %34 = sbr.rel (0) target = $region13
    $region12: #{tpu_custom_call.1} parent=1 // pred_region
      _
    $region13: #{tpu_custom_call.1} parent=1 // pred_fallthru
      _
    // Predicated region
    $region14: #{tpu_custom_call.1} parent=1 // pred_check
      _
    $region15: #{tpu_custom_call.1} parent=1 // pred_check_branch
      %36 = sbr.rel (0) target = $region17
    $region16: #{tpu_custom_call.1} parent=1 // pred_region
      %38 = dma.done [#allocation4], 1024
    $region17: #{tpu_custom_call.1} parent=1 // pred_fallthru
      _
    // Predicated region
    $region18: #{tpu_custom_call.1} parent=1 // pred_check
      _
    $region19: #{tpu_custom_call.1} parent=1 // pred_check_branch
      %40 = sbr.rel (0) target = $region21
    $region20: #{tpu_custom_call.1} parent=1 // pred_region
      %42 = dma.done [#allocation6], 128
    $region21: #{tpu_custom_call.1} parent=1 // pred_fallthru
      _
    %v43 = vld [vmem:[#allocation3] sm:$0xff]
    %v44 = vld [vmem:[#allocation3 + $0x8] sm:$0xff]
    %v45 = vld [vmem:[#allocation3 + $0x10] sm:$0xff]
    %v46 = vld [vmem:[#allocation3 + $0x18] sm:$0xff]
    %v47 = vld [vmem:[#allocation5] sm:$0xf]
    %v49 = vperm.slane %v47, 0
    %v50 = vperm.slane %v47, 1
    %v51 = vperm.slane %v47, 2
    %v52 = vperm.slane %v47, 3
    %v57 = vmul.f32 %v43, %v49
    %v58 = vmul.f32 %v44, %v50
    %v59 = vmul.f32 %v45, %v51
    %v60 = vmul.f32 %v46, %v52
    %v61 = vadd.f32 %v57, %v58
    %v62 = vadd.f32 %v61, %v59
    %v63 = vadd.f32 %v62, %v60
    %64 = vadd.xlane.f32.xlu0 %v63
    %v65 = vpop.xlane.xlu0 %64
    %v66 = vadd.f32 %v65, 0.0
    %v67 = vld [vmem:[#allocation3 + $0x20] sm:$0xff]
    %v68 = vld [vmem:[#allocation3 + $0x28] sm:$0xff]
    %v69 = vld [vmem:[#allocation3 + $0x30] sm:$0xff]
    %v70 = vld [vmem:[#allocation3 + $0x38] sm:$0xff]
    %v71 = vld [vmem:[#allocation5 + $0x4] sm:$0xf]
    %v73 = vperm.slane %v71, 0
    %v74 = vperm.slane %v71, 1
    %v75 = vperm.slane %v71, 2
    %v76 = vperm.slane %v71, 3
    %v81 = vmul.f32 %v67, %v73
    %v82 = vmul.f32 %v68, %v74
    %v83 = vmul.f32 %v69, %v75
    %v84 = vmul.f32 %v70, %v76
    %v85 = vadd.f32 %v81, %v82
    %v86 = vadd.f32 %v85, %v83
    %vm87 = vcmask 850944
    %v88 = vsel %vm87, %v84, 0.0
    %v89 = vadd.f32 %v86, %v88
    %90 = vadd.xlane.f32.xlu0 %v89
    %v91 = vpop.xlane.xlu0 %90
    %v92 = vadd.f32 %v66, %v91
    %s93 = sld [smem:[#allocation2]]
    %v94 = vstv %s93
    %v95 = vadd.f32 %v92, %v94
    %vm96 = vcmask 7168
    %97 = vst.msk [vmem:[%s3] sm:$0xff] %vm96, %v95
    // Predicated region
    $region22: #{tpu_custom_call.1} parent=1 // pred_check
      _
    $region23: #{tpu_custom_call.1} parent=1 // pred_check_branch
      %99 = sbr.rel (0) target = $region25
    $region24: #{tpu_custom_call.1} parent=1 // pred_region
      _
    $region25: #{tpu_custom_call.1} parent=1 // pred_fallthru
      _
    // Predicated region
    $region26: #{tpu_custom_call.1} parent=1 // pred_check
      _
    $region27: #{tpu_custom_call.1} parent=1 // pred_check_branch
      %101 = sbr.rel (0) target = $region29
    $region28: #{tpu_custom_call.1} parent=1 // pred_region
      _
    $region29: #{tpu_custom_call.1} parent=1 // pred_fallthru
      _
    %102 = vsyncpa [#allocation4], 1
    %103 = vsyncpa [#allocation6], 1

</llo_original>
